<compile_context>
chip_gen: v7x
topology: tpu7x:2x2x1
jax: 0.10.0
libtpu: 0.0.40
codegen_flags: <defaults>
</compile_context>

<pallas_src>
import math

import jax
import jax.numpy as jnp
from jax.experimental import pallas as pl
from jax.experimental.pallas import tpu as pltpu

LANE = 128
_GELU_C = math.sqrt(2.0 / math.pi)

# Tile layer-1 over K only once the folded bf16 w1 gets large enough to
# threaten the v7x VMEM budget (64 MiB physical / 32 MiB default scoped).
_K_TILE_THRESHOLD_BYTES = 24 << 20
_DEFAULT_TK = 512


def _gelu_tanh(x):
    # Computed in f32 (inputs are the f32 matmul accumulator + f32 bias).
    return 0.5 * x * (1.0 + jnp.tanh(_GELU_C * (x + 0.044715 * x * x * x)))


# --------------------------------------------------------------------------
# Kernels
# --------------------------------------------------------------------------
def classifier_kernel(x_ref, w1_ref, b1_ref, w2_ref, b2_ref, w3_ref, b3_ref,
                      o_ref):
    """Grid-less fused MLP: all operands in one VMEM tile (small D path)."""
    h = jnp.dot(x_ref[...], w1_ref[...],
                preferred_element_type=jnp.float32) + b1_ref[...]      # (B, 256) f32
    h = _gelu_tanh(h)
    h = jnp.dot(h.astype(w2_ref.dtype), w2_ref[...],
                preferred_element_type=jnp.float32) + b2_ref[...]      # (B, H2p) f32
    h = _gelu_tanh(h)
    out = jnp.dot(h.astype(w3_ref.dtype), w3_ref[...],
                  preferred_element_type=jnp.float32) + b3_ref[...]    # (B, Cp) f32
    o_ref[...] = out.astype(o_ref.dtype)


def classifier_kernel_ktiled(x_ref, w1_ref, b1_ref, w2_ref, b2_ref, w3_ref,
                             b3_ref, o_ref, acc_ref):
    """Layer-1 K-tiled fused MLP (large D path): grid=(D_pad//tk,)."""
    k = pl.program_id(0)

    @pl.when(k == 0)
    def _():
        acc_ref[...] = jnp.zeros_like(acc_ref)

    acc_ref[...] += jnp.dot(x_ref[...], w1_ref[...],
                            preferred_element_type=jnp.float32)

    @pl.when(k == pl.num_programs(0) - 1)
    def _():
        h = _gelu_tanh(acc_ref[...] + b1_ref[...])
        h = jnp.dot(h.astype(w2_ref.dtype), w2_ref[...],
                    preferred_element_type=jnp.float32) + b2_ref[...]
        h = _gelu_tanh(h)
        out = jnp.dot(h.astype(w3_ref.dtype), w3_ref[...],
                      preferred_element_type=jnp.float32) + b3_ref[...]
        o_ref[...] = out.astype(o_ref.dtype)


# --------------------------------------------------------------------------
# Host-side helpers
# --------------------------------------------------------------------------
def _round_up(n, m):
    return ((n + m - 1) // m) * m


def _pad_cols(a, n):
    pad = n - a.shape[-1]
    return a if pad == 0 else jnp.pad(a, [(0, 0)] * (a.ndim - 1) + [(0, pad)])


def _pad_rows(a, n):
    pad = n - a.shape[0]
    return a if pad == 0 else jnp.pad(a, [(0, pad)] + [(0, 0)] * (a.ndim - 1))


def _vmem_limit(needed_bytes):
    # Generous headroom for activations / internal scratch, capped below the
    # v7x physical VMEM (64 MiB); floor at 16 MiB (<= every chip's default).
    return int(min(64 << 20, max(2 * needed_bytes + (8 << 20), 16 << 20)))


def prepare_params(params, *, eps=1e-5, tk=None):
    """One-time preparation: fold eval-mode BN into the Linears, pad lane dims
    to multiples of 128, cast weights to bf16.  Call ONCE and reuse — this is
    deliberately hoisted out of the per-forward path."""
    s1 = params["g1"] / jnp.sqrt(params["v1"] + eps)            # (256,)
    w1f = params["w1"] * s1[None, :]                            # (D, 256)
    b1f = (params["b1"] - params["m1"]) * s1 + params["be1"]    # (256,)

    s2 = params["g2"] / jnp.sqrt(params["v2"] + eps)            # (H2,)
    w2f = params["w2"] * s2[None, :]                            # (256, H2)
    b2f = (params["b2"] - params["m2"]) * s2 + params["be2"]    # (H2,)

    D, H1 = w1f.shape
    H2 = w2f.shape[1]
    C = params["w3"].shape[1]
    H2p = _round_up(H2, LANE)
    Cp = _round_up(C, LANE)

    # Decide whether the layer-1 matmul needs K tiling (large D only).
    if tk is None and D * H1 * 2 > _K_TILE_THRESHOLD_BYTES:
        tk = _DEFAULT_TK
    d_pad = _round_up(D, tk) if tk is not None else _round_up(D, LANE)

    # Zero-padding is exact: padded x cols x padded w1 rows contribute 0;
    # padded w2 cols give 0 pre-activations whose bias is 0 and gelu(0)=0;
    # padded w3 rows are 0 so they add nothing to the logits.
    w1p = _pad_rows(w1f, d_pad).astype(jnp.bfloat16)                       # (Dp, 256)
    w2p = _pad_cols(w2f, H2p).astype(jnp.bfloat16)                         # (256, H2p)
    w3p = _pad_cols(_pad_rows(params["w3"], H2p), Cp).astype(jnp.bfloat16)  # (H2p, Cp)

    return dict(
        w1=w1p, b1=b1f[None, :].astype(jnp.float32),
        w2=w2p, b2=_pad_cols(b2f[None, :], H2p).astype(jnp.float32),
        w3=w3p, b3=_pad_cols(params["b3"][None, :], Cp).astype(jnp.float32),
        d=D, d_pad=d_pad, tk=tk, c=C, cp=Cp, h1=H1, h2p=H2p,
    )


def classifier_forward(x_dense, prepared, *, return_padded=False):
    """Classifier forward. x_dense: (B, roi_num, node_input_dim) -> (B, 2)
    (or (B, 128) lane-padded logits when return_padded=True)."""
    B = x_dense.shape[0]
    D, d_pad = prepared["d"], prepared["d_pad"]
    H1, H2p = prepared["h1"], prepared["h2p"]
    C, Cp = prepared["c"], prepared["cp"]
    tk = prepared["tk"]

    x2d = x_dense.reshape(B, -1)
    assert x2d.shape[1] == D, (x2d.shape, D)
    x2d = _pad_cols(x2d.astype(jnp.bfloat16), d_pad)              # (B, Dp) bf16

    args = (x2d, prepared["w1"], prepared["b1"], prepared["w2"], prepared["b2"],
            prepared["w3"], prepared["b3"])

    operand_bytes = sum(a.size * a.dtype.itemsize for a in args) + B * Cp * 4
    cost = pl.CostEstimate(
        flops=2 * B * (d_pad * H1 + H1 * H2p + H2p * Cp),
        transcendentals=B * (H1 + H2p),
        bytes_accessed=operand_bytes,
    )

    if tk is None:
        # Small D: one VMEM tile per operand, no grid (no pipeline-step cost).
        vmem = pl.BlockSpec(memory_space=pltpu.MemorySpace.VMEM)
        out_pad = pl.pallas_call(
            classifier_kernel,
            out_shape=jax.ShapeDtypeStruct((B, Cp), jnp.float32),
            in_specs=[vmem] * 7,
            out_specs=vmem,
            compiler_params=pltpu.CompilerParams(
                vmem_limit_bytes=_vmem_limit(operand_bytes + B * H1 * 4)),
            cost_estimate=cost,
        )(*args)
    else:
        # Large D: tile the layer-1 contraction over K with an f32 accumulator;
        # w2/w3/biases stay VMEM-resident (constant index_map), x/w1 blocks are
        # double-buffered by the pipeline.
        nk = d_pad // tk
        step_bytes = (2 * (B * tk + tk * H1) * 2        # double-buffered bf16 x/w1 blocks
                      + (H1 * H2p + H2p * Cp) * 2       # resident bf16 w2/w3
                      + (H1 + H2p + Cp) * 4             # f32 biases
                      + B * (H1 + Cp) * 4)              # f32 accumulator + output
        grid_spec = pltpu.PrefetchScalarGridSpec(
            num_scalar_prefetch=0,
            grid=(nk,),
            in_specs=[
                pl.BlockSpec((B, tk), lambda k: (0, k)),
                pl.BlockSpec((tk, H1), lambda k: (k, 0)),
                pl.BlockSpec((1, H1), lambda k: (0, 0)),
                pl.BlockSpec((H1, H2p), lambda k: (0, 0)),
                pl.BlockSpec((1, H2p), lambda k: (0, 0)),
                pl.BlockSpec((H2p, Cp), lambda k: (0, 0)),
                pl.BlockSpec((1, Cp), lambda k: (0, 0)),
            ],
            out_specs=pl.BlockSpec((B, Cp), lambda k: (0, 0)),
            scratch_shapes=[pltpu.VMEM((B, H1), jnp.float32)],
        )
        out_pad = pl.pallas_call(
            classifier_kernel_ktiled,
            out_shape=jax.ShapeDtypeStruct((B, Cp), jnp.float32),
            grid_spec=grid_spec,
            compiler_params=pltpu.CompilerParams(
                dimension_semantics=("arbitrary",),
                vmem_limit_bytes=_vmem_limit(step_bytes)),
            cost_estimate=cost,
        )(*args)

    if return_padded:
        return out_pad            # (B, Cp) — skip the slice if consumer allows
    return out_pad[:, :C]         # (B, 2)


def reference_classifier(x_dense, params, *, eps=1e-5):
    """Pure-JAX f32 reference mirroring the PyTorch eval forward."""
    hp = jax.lax.Precision.HIGHEST
    B = x_dense.shape[0]
    h = x_dense.reshape(B, -1)
    h = jnp.dot(h, params["w1"], precision=hp) + params["b1"]
    h = (h - params["m1"]) / jnp.sqrt(params["v1"] + eps) * params["g1"] + params["be1"]
    h = _gelu_tanh(h)
    h = jnp.dot(h, params["w2"], precision=hp) + params["b2"]
    h = (h - params["m2"]) / jnp.sqrt(params["v2"] + eps) * params["g2"] + params["be2"]
    h = _gelu_tanh(h)
    return jnp.dot(h, params["w3"], precision=hp) + params["b3"]


if __name__ == "__main__":
    # Small shapes consistent with the module: batch=8, roi_num=16,
    # node_input_dim=16 -> flattened D = 256, MLP 256 -> 256 -> 32 -> 2.
    B, roi_num, node_input_dim = 8, 16, 16
    D = roi_num * node_input_dim
    H1, H2, C = 256, 32, 2

    key = jax.random.PRNGKey(0)
    keys = jax.random.split(key, 16)

    x = jax.random.normal(keys[0], (B, roi_num, node_input_dim), dtype=jnp.float32)

    def linear_init(kw, kb, fan_in, fan_out):
        bound = 1.0 / math.sqrt(fan_in)
        w = jax.random.uniform(kw, (fan_in, fan_out), jnp.float32, -bound, bound)
        b = jax.random.uniform(kb, (fan_out,), jnp.float32, -bound, bound)
        return w, b

    w1, b1 = linear_init(keys[1], keys[2], D, H1)
    w2, b2 = linear_init(keys[3], keys[4], H1, H2)
    w3, b3 = linear_init(keys[5], keys[6], H2, C)

    params = dict(
        w1=w1, b1=b1,
        g1=jax.random.uniform(keys[7], (H1,), jnp.float32, 0.5, 1.5),
        be1=jax.random.normal(keys[8], (H1,), jnp.float32) * 0.1,
        m1=jax.random.normal(keys[9], (H1,), jnp.float32) * 0.1,
        v1=jax.random.uniform(keys[10], (H1,), jnp.float32, 0.5, 1.5),
        w2=w2, b2=b2,
        g2=jax.random.uniform(keys[11], (H2,), jnp.float32, 0.5, 1.5),
        be2=jax.random.normal(keys[12], (H2,), jnp.float32) * 0.1,
        m2=jax.random.normal(keys[13], (H2,), jnp.float32) * 0.1,
        v2=jax.random.uniform(keys[14], (H2,), jnp.float32, 0.5, 1.5),
        w3=w3, b3=b3,
    )

    # One-time weight preparation (hoisted out of the per-call path).
    prepared = prepare_params(params)              # auto -> grid-less path (D small)
    prepared_tiled = prepare_params(params, tk=128)  # force K-tiled path (2 K steps)

    out = jax.block_until_ready(classifier_forward(x, prepared))
    out_tiled = jax.block_until_ready(classifier_forward(x, prepared_tiled))

    ref = reference_classifier(x, params)
    assert out.shape == (B, C)
    assert out_tiled.shape == (B, C)

    # bf16 MXU inputs (f32 accumulation) -> loosened tolerance vs f32 reference.
    tol = dict(atol=5e-2, rtol=5e-2)
    d0 = jnp.max(jnp.abs(out - ref))
    d1 = jnp.max(jnp.abs(out_tiled - ref))
    assert jnp.allclose(out, ref, **tol), f"single-pass max abs diff {d0}"
    assert jnp.allclose(out_tiled, ref, **tol), f"k-tiled max abs diff {d1}"

    print("KERNEL_OK")
</pallas_src>

<mosaic_0001>
module attributes {stable_mosaic.version = 11 : i64} {
  func.func @classifier_kernel(%arg0: memref<8x256xbf16, #tpu.memory_space<vmem>>, %arg1: memref<256x256xbf16, #tpu.memory_space<vmem>>, %arg2: memref<1x256xf32, #tpu.memory_space<vmem>>, %arg3: memref<256x128xbf16, #tpu.memory_space<vmem>>, %arg4: memref<1x128xf32, #tpu.memory_space<vmem>>, %arg5: memref<128x128xbf16, #tpu.memory_space<vmem>>, %arg6: memref<1x128xf32, #tpu.memory_space<vmem>>, %arg7: memref<8x128xf32, #tpu.memory_space<vmem>>) attributes {dimension_semantics = [], scalar_prefetch = 0 : i64, scratch_operands = 0 : i64, tpu.core_type = #tpu.core_type<tc>} {
    %c0 = arith.constant 0 : index
    %c0_0 = arith.constant 0 : index
    %0 = vector.load %arg0[%c0, %c0_0] : memref<8x256xbf16, #tpu.memory_space<vmem>>, vector<8x256xbf16>
    %c0_1 = arith.constant 0 : index
    %c0_2 = arith.constant 0 : index
    %1 = vector.load %arg1[%c0_1, %c0_2] : memref<256x256xbf16, #tpu.memory_space<vmem>>, vector<256x256xbf16>
    %cst = arith.constant dense<0.000000e+00> : vector<8x256xf32>
    %2 = tpu.matmul %0, %1, %cst {dimension_numbers = #tpu.dot_dimension_numbers<[1], [0], [0], [1], [0, 0, 1, 1], [], []>} : vector<8x256xbf16>, vector<256x256xbf16>, vector<8x256xf32> -> vector<8x256xf32>
    %c0_3 = arith.constant 0 : index
    %c0_4 = arith.constant 0 : index
    %3 = vector.load %arg2[%c0_3, %c0_4] : memref<1x256xf32, #tpu.memory_space<vmem>>, vector<1x256xf32>
    %4 = vector.broadcast %3 : vector<1x256xf32> to vector<8x256xf32>
    %5 = arith.addf %2, %4 : vector<8x256xf32>
    %cst_5 = arith.constant 5.000000e-01 : f32
    %6 = vector.broadcast %cst_5 : f32 to vector<8x256xf32>
    %7 = arith.mulf %6, %5 : vector<8x256xf32>
    %cst_6 = arith.constant 4.471500e-02 : f32
    %8 = vector.broadcast %cst_6 : f32 to vector<8x256xf32>
    %9 = arith.mulf %8, %5 : vector<8x256xf32>
    %10 = arith.mulf %9, %5 : vector<8x256xf32>
    %11 = arith.mulf %10, %5 : vector<8x256xf32>
    %12 = arith.addf %5, %11 : vector<8x256xf32>
    %cst_7 = arith.constant 0.797884583 : f32
    %13 = vector.broadcast %cst_7 : f32 to vector<8x256xf32>
    %14 = arith.mulf %13, %12 : vector<8x256xf32>
    %15 = math.tanh %14 : vector<8x256xf32>
    %cst_8 = arith.constant 1.000000e+00 : f32
    %16 = vector.broadcast %cst_8 : f32 to vector<8x256xf32>
    %17 = arith.addf %16, %15 : vector<8x256xf32>
    %18 = arith.mulf %7, %17 : vector<8x256xf32>
    %19 = arith.truncf %18 : vector<8x256xf32> to vector<8x256xbf16>
    %c0_9 = arith.constant 0 : index
    %c0_10 = arith.constant 0 : index
    %20 = vector.load %arg3[%c0_9, %c0_10] : memref<256x128xbf16, #tpu.memory_space<vmem>>, vector<256x128xbf16>
    %cst_11 = arith.constant dense<0.000000e+00> : vector<8x128xf32>
    %21 = tpu.matmul %19, %20, %cst_11 {dimension_numbers = #tpu.dot_dimension_numbers<[1], [0], [0], [1], [0, 0, 1, 1], [], []>} : vector<8x256xbf16>, vector<256x128xbf16>, vector<8x128xf32> -> vector<8x128xf32>
    %c0_12 = arith.constant 0 : index
    %c0_13 = arith.constant 0 : index
    %22 = vector.load %arg4[%c0_12, %c0_13] : memref<1x128xf32, #tpu.memory_space<vmem>>, vector<1x128xf32>
    %23 = vector.broadcast %22 : vector<1x128xf32> to vector<8x128xf32>
    %24 = arith.addf %21, %23 : vector<8x128xf32>
    %cst_14 = arith.constant 5.000000e-01 : f32
    %25 = vector.broadcast %cst_14 : f32 to vector<8x128xf32>
    %26 = arith.mulf %25, %24 : vector<8x128xf32>
    %cst_15 = arith.constant 4.471500e-02 : f32
    %27 = vector.broadcast %cst_15 : f32 to vector<8x128xf32>
    %28 = arith.mulf %27, %24 : vector<8x128xf32>
    %29 = arith.mulf %28, %24 : vector<8x128xf32>
    %30 = arith.mulf %29, %24 : vector<8x128xf32>
    %31 = arith.addf %24, %30 : vector<8x128xf32>
    %cst_16 = arith.constant 0.797884583 : f32
    %32 = vector.broadcast %cst_16 : f32 to vector<8x128xf32>
    %33 = arith.mulf %32, %31 : vector<8x128xf32>
    %34 = math.tanh %33 : vector<8x128xf32>
    %cst_17 = arith.constant 1.000000e+00 : f32
    %35 = vector.broadcast %cst_17 : f32 to vector<8x128xf32>
    %36 = arith.addf %35, %34 : vector<8x128xf32>
    %37 = arith.mulf %26, %36 : vector<8x128xf32>
    %38 = arith.truncf %37 : vector<8x128xf32> to vector<8x128xbf16>
    %c0_18 = arith.constant 0 : index
    %c0_19 = arith.constant 0 : index
    %39 = vector.load %arg5[%c0_18, %c0_19] : memref<128x128xbf16, #tpu.memory_space<vmem>>, vector<128x128xbf16>
    %cst_20 = arith.constant dense<0.000000e+00> : vector<8x128xf32>
    %40 = tpu.matmul %38, %39, %cst_20 {dimension_numbers = #tpu.dot_dimension_numbers<[1], [0], [0], [1], [0, 0, 1, 1], [], []>} : vector<8x128xbf16>, vector<128x128xbf16>, vector<8x128xf32> -> vector<8x128xf32>
    %c0_21 = arith.constant 0 : index
    %c0_22 = arith.constant 0 : index
    %41 = vector.load %arg6[%c0_21, %c0_22] : memref<1x128xf32, #tpu.memory_space<vmem>>, vector<1x128xf32>
    %42 = vector.broadcast %41 : vector<1x128xf32> to vector<8x128xf32>
    %43 = arith.addf %40, %42 : vector<8x128xf32>
    %c0_23 = arith.constant 0 : index
    %c0_24 = arith.constant 0 : index
    %44 = vector.load %arg7[%c0_23, %c0_24] : memref<8x128xf32, #tpu.memory_space<vmem>>, vector<8x128xf32>
    tpu.vector_store %arg7[%c0_23, %c0_24], %43 {strides = array<i32>} : memref<8x128xf32, #tpu.memory_space<vmem>>, vector<8x128xf32>,
    return
  }
}

</mosaic_0001>

<llo_original>
// kernel: tpu_custom_call.1
$region0: #{tpu_custom_call.1}
  #allocation0 [shape = 'u32[]', space=smem, size = 0x4, offset = 0x4, fixed_abs, tag = 'smem constant byte address 0x4 - core index']
  #allocation1 [shape = 'u32[144,128]{1,0:T(1,128)}', space=vmem, size = 0x12000, scoped, tag = 'internal scratch']
  %s0 = inlined_call_operand.hbm [shape: bf16[8,256], index: 0, kind: input, shape index: {}]
  %s1 = inlined_call_operand.hbm [shape: bf16[256,256], index: 1, kind: input, shape index: {}]
  %s2 = inlined_call_operand.vmem [shape: f32[1,256], index: 2, kind: input, shape index: {}]
  %s3 = inlined_call_operand.hbm [shape: bf16[256,128], index: 3, kind: input, shape index: {}]
  %s4 = inlined_call_operand.vmem [shape: f32[1,128], index: 4, kind: input, shape index: {}]
  %s5 = inlined_call_operand.hbm [shape: bf16[128,128], index: 5, kind: input, shape index: {}]
  %s6 = inlined_call_operand.vmem [shape: f32[1,128], index: 6, kind: input, shape index: {}]
  %s7 = inlined_call_operand.hbm [shape: f32[8,128], index: 7, kind: output, shape index: {}]
  %s8 = sld [smem:[#allocation0]]
  $region54: #{tpu_custom_call.1} parent=0
    _
  %s10 = ssub.s32 1, %s8
  %s11 = scalar_select 0, %s10, %s8
  $region1: #{tpu_custom_call.1} parent=0
    #allocation2 [shape = 'u8[4096]{0}', space=vmem, size = 0x1000, scoped, tag = 'input window, operand 0, single buffered']
    #allocation3 [shape = 's32[1]{0}', space=sflag, size = 0x4, scoped, tag = 'scoped memory for tpu_custom_call.1']
    #allocation4 [shape = 's32[1]{0}', space=sflag, size = 0x4, scoped, tag = 'scoped memory for tpu_custom_call.1']
    #allocation5 [shape = 'u8[131072]{0}', space=vmem, size = 0x20000, scoped, tag = 'input window, operand 1, single buffered']
    #allocation6 [shape = 's32[1]{0}', space=sflag, size = 0x4, scoped, tag = 'scoped memory for tpu_custom_call.1']
    #allocation7 [shape = 'u8[65536]{0}', space=vmem, size = 0x10000, scoped, tag = 'input window, operand 3, single buffered']
    #allocation8 [shape = 'u8[32768]{0}', space=vmem, size = 0x8000, scoped, tag = 'input window, operand 5, single buffered']
    #allocation9 [shape = 's32[1]{0}', space=sflag, size = 0x4, scoped, tag = 'scoped memory for tpu_custom_call.1']
    #allocation10 [shape = 'u8[4096]{0}', space=vmem, size = 0x1000, scoped, tag = 'output window, operand 0, single buffered']
    %12 = vsyncpa [#allocation3], 0
    %13 = vsyncpa [#allocation6], 0
    %14 = vsyncpa [#allocation9], 0
    %15 = vsyncpa [#allocation4], 0
    // Predicated region
    $region2: #{tpu_custom_call.1} parent=1 // pred_check
      _
    $region3: #{tpu_custom_call.1} parent=1 // pred_check_branch
      %17 = sbr.rel (0) target = $region5
    $region4: #{tpu_custom_call.1} parent=1 // pred_region
      %s19 = ssub.s32 128, 128
      %20 = vsyncadd [#allocation3], %s19
      %s22 = sshll.u32 [#allocation2], 4
      %s23 = int_to_ptr.vmem [resolvable:$true] %s22
      %25 = dma.hbm_to_vmem [thread:$0]  %s0, 128, %s23, [#allocation3]
    $region5: #{tpu_custom_call.1} parent=1 // pred_fallthru
      _
    // Predicated region
    $region6: #{tpu_custom_call.1} parent=1 // pred_check
      _
    $region7: #{tpu_custom_call.1} parent=1 // pred_check_branch
      %27 = sbr.rel (0) target = $region9
    $region8: #{tpu_custom_call.1} parent=1 // pred_region
      %s29 = ssub.s32 4096, 4096
      %30 = vsyncadd [#allocation6], %s29
      %s31 = sshll.u32 [#allocation5], 4
      %s32 = int_to_ptr.vmem [resolvable:$true] %s31
      %37 = dma.hbm_to_vmem [thread:$0]  %s1, 4096, %s32, [#allocation6], 128, 128, 8
    $region9: #{tpu_custom_call.1} parent=1 // pred_fallthru
      _
    // Predicated region
    $region10: #{tpu_custom_call.1} parent=1 // pred_check
      _
    $region11: #{tpu_custom_call.1} parent=1 // pred_check_branch
      %39 = sbr.rel (0) target = $region13
    $region12: #{tpu_custom_call.1} parent=1 // pred_region
      _
    $region13: #{tpu_custom_call.1} parent=1 // pred_fallthru
      _
    // Predicated region
    $region14: #{tpu_custom_call.1} parent=1 // pred_check
      _
    $region15: #{tpu_custom_call.1} parent=1 // pred_check_branch
      %41 = sbr.rel (0) target = $region17
    $region16: #{tpu_custom_call.1} parent=1 // pred_region
      %s43 = ssub.s32 2048, 2048
      %44 = vsyncadd [#allocation6], %s43
      %s45 = sshll.u32 [#allocation7], 4
      %s46 = int_to_ptr.vmem [resolvable:$true] %s45
      %51 = dma.hbm_to_vmem [thread:$0]  %s3, 2048, %s46, [#allocation6], 64, 64, 4
    $region17: #{tpu_custom_call.1} parent=1 // pred_fallthru
      _
    // Predicated region
    $region18: #{tpu_custom_call.1} parent=1 // pred_check
      _
    $region19: #{tpu_custom_call.1} parent=1 // pred_check_branch
      %53 = sbr.rel (0) target = $region21
    $region20: #{tpu_custom_call.1} parent=1 // pred_region
      _
    $region21: #{tpu_custom_call.1} parent=1 // pred_fallthru
      _
    // Predicated region
    $region22: #{tpu_custom_call.1} parent=1 // pred_check
      _
    $region23: #{tpu_custom_call.1} parent=1 // pred_check_branch
      %55 = sbr.rel (0) target = $region25
    $region24: #{tpu_custom_call.1} parent=1 // pred_region
      %s57 = ssub.s32 1024, 1024
      %58 = vsyncadd [#allocation9], %s57
      %s59 = sshll.u32 [#allocation8], 4
      %s60 = int_to_ptr.vmem [resolvable:$true] %s59
      %65 = dma.hbm_to_vmem [thread:$0]  %s5, 1024, %s60, [#allocation9], 64, 64, 4
    $region25: #{tpu_custom_call.1} parent=1 // pred_fallthru
      _
    // Predicated region
    $region26: #{tpu_custom_call.1} parent=1 // pred_check
      _
    $region27: #{tpu_custom_call.1} parent=1 // pred_check_branch
      %67 = sbr.rel (0) target = $region29
    $region28: #{tpu_custom_call.1} parent=1 // pred_region
      _
    $region29: #{tpu_custom_call.1} parent=1 // pred_fallthru
      _
    // Predicated region
    $region30: #{tpu_custom_call.1} parent=1 // pred_check
      _
    $region31: #{tpu_custom_call.1} parent=1 // pred_check_branch
      %69 = sbr.rel (0) target = $region33
    $region32: #{tpu_custom_call.1} parent=1 // pred_region
      %70 = dma.done [#allocation3], 128
    $region33: #{tpu_custom_call.1} parent=1 // pred_fallthru
      _
    // Predicated region
    $region34: #{tpu_custom_call.1} parent=1 // pred_check
      _
    $region35: #{tpu_custom_call.1} parent=1 // pred_check_branch
      %72 = sbr.rel (0) target = $region37
    $region36: #{tpu_custom_call.1} parent=1 // pred_region
      %73 = dma.done [#allocation6], 4096
    $region37: #{tpu_custom_call.1} parent=1 // pred_fallthru
      _
    // Predicated region
    $region38: #{tpu_custom_call.1} parent=1 // pred_check
      _
    $region39: #{tpu_custom_call.1} parent=1 // pred_check_branch
      %75 = sbr.rel (0) target = $region41
    $region40: #{tpu_custom_call.1} parent=1 // pred_region
      %76 = dma.done [#allocation6], 2048
    $region41: #{tpu_custom_call.1} parent=1 // pred_fallthru
      _
    // Predicated region
    $region42: #{tpu_custom_call.1} parent=1 // pred_check
      _
    $region43: #{tpu_custom_call.1} parent=1 // pred_check_branch
      %78 = sbr.rel (0) target = $region45
    $region44: #{tpu_custom_call.1} parent=1 // pred_region
      %79 = dma.done [#allocation9], 1024
    $region45: #{tpu_custom_call.1} parent=1 // pred_fallthru
      _
    %v81 = vld [vmem:[#allocation2] sm:$0xff]
    %v82 = vld [vmem:[#allocation5] sm:$0xff]
    %v83 = vld [vmem:[#allocation5 + $0x8] sm:$0xff]
    %v84 = vld [vmem:[#allocation5 + $0x10] sm:$0xff]
    %v85 = vld [vmem:[#allocation5 + $0x18] sm:$0xff]
    %v86 = vld [vmem:[#allocation5 + $0x20] sm:$0xff]
    %v87 = vld [vmem:[#allocation5 + $0x28] sm:$0xff]
    %v88 = vld [vmem:[#allocation5 + $0x30] sm:$0xff]
    %v89 = vld [vmem:[#allocation5 + $0x38] sm:$0xff]
    %v90 = vld [vmem:[#allocation5 + $0x40] sm:$0xff]
    %v91 = vld [vmem:[#allocation5 + $0x48] sm:$0xff]
    %v92 = vld [vmem:[#allocation5 + $0x50] sm:$0xff]
    %v93 = vld [vmem:[#allocation5 + $0x58] sm:$0xff]
    %v94 = vld [vmem:[#allocation5 + $0x60] sm:$0xff]
    %v95 = vld [vmem:[#allocation5 + $0x68] sm:$0xff]
    %v96 = vld [vmem:[#allocation5 + $0x70] sm:$0xff]
    %v97 = vld [vmem:[#allocation5 + $0x78] sm:$0xff]
    %v98 = vld [vmem:[#allocation5 + $0x80] sm:$0xff]
    %v99 = vld [vmem:[#allocation5 + $0x88] sm:$0xff]
    %v100 = vld [vmem:[#allocation5 + $0x90] sm:$0xff]
    %v101 = vld [vmem:[#allocation5 + $0x98] sm:$0xff]
    %v102 = vld [vmem:[#allocation5 + $0xa0] sm:$0xff]
    %v103 = vld [vmem:[#allocation5 + $0xa8] sm:$0xff]
    %v104 = vld [vmem:[#allocation5 + $0xb0] sm:$0xff]
    %v105 = vld [vmem:[#allocation5 + $0xb8] sm:$0xff]
    %v106 = vld [vmem:[#allocation5 + $0xc0] sm:$0xff]
    %v107 = vld [vmem:[#allocation5 + $0xc8] sm:$0xff]
    %v108 = vld [vmem:[#allocation5 + $0xd0] sm:$0xff]
    %v109 = vld [vmem:[#allocation5 + $0xd8] sm:$0xff]
    %v110 = vld [vmem:[#allocation5 + $0xe0] sm:$0xff]
    %v111 = vld [vmem:[#allocation5 + $0xe8] sm:$0xff]
    %v112 = vld [vmem:[#allocation5 + $0xf0] sm:$0xff]
    %v113 = vld [vmem:[#allocation5 + $0xf8] sm:$0xff]
    %v114 = vld [vmem:[%s2] sm:$0x3]
    %v116 = vlaneseq
    %v117 = vshrl.u32 %v116, 7
    %v118 = vsub.s32 0, %v117
    %v119 = vrot.slane %v114, %v118
    %v120 = vlaneseq
    %v121 = vshrl.u32 %v120, 7
    %v122 = vsub.s32 1, %v121
    %v123 = vrot.slane %v114, %v122
    %v127 = vunpack.c.l.b16 %v81
    %v128 = vunpack.c.h.b16 %v81
    %v129 = vpack.c.b16 %v127, %v127
    %v130 = vpack.c.b16 %v128, %v128
    %v165 = vunpack.c.l.b16 %v82
    %v166 = vunpack.c.h.b16 %v82
    %v167 = vunpack.c.l.b16 %v83
    %v168 = vunpack.c.h.b16 %v83
    %v169 = vunpack.c.l.b16 %v84
    %v170 = vunpack.c.h.b16 %v84
    %v171 = vunpack.c.l.b16 %v85
    %v172 = vunpack.c.h.b16 %v85
    %v173 = vunpack.c.l.b16 %v86
    %v174 = vunpack.c.h.b16 %v86
    %v175 = vunpack.c.l.b16 %v87
    %v176 = vunpack.c.h.b16 %v87
    %v177 = vunpack.c.l.b16 %v88
    %v178 = vunpack.c.h.b16 %v88
    %v179 = vunpack.c.l.b16 %v89
    %v180 = vunpack.c.h.b16 %v89
    %v181 = vunpack.c.l.b16 %v90
    %v182 = vunpack.c.h.b16 %v90
    %v183 = vunpack.c.l.b16 %v91
    %v184 = vunpack.c.h.b16 %v91
    %v185 = vunpack.c.l.b16 %v92
    %v186 = vunpack.c.h.b16 %v92
    %v187 = vunpack.c.l.b16 %v93
    %v188 = vunpack.c.h.b16 %v93
    %v189 = vunpack.c.l.b16 %v94
    %v190 = vunpack.c.h.b16 %v94
    %v191 = vunpack.c.l.b16 %v95
    %v192 = vunpack.c.h.b16 %v95
    %v193 = vunpack.c.l.b16 %v96
    %v194 = vunpack.c.h.b16 %v96
    %v195 = vunpack.c.l.b16 %v97
    %v196 = vunpack.c.h.b16 %v97
    %v197 = vunpack.c.l.b16 %v98
    %v198 = vunpack.c.h.b16 %v98
    %v199 = vunpack.c.l.b16 %v99
    %v200 = vunpack.c.h.b16 %v99
    %v201 = vunpack.c.l.b16 %v100
    %v202 = vunpack.c.h.b16 %v100
    %v203 = vunpack.c.l.b16 %v101
    %v204 = vunpack.c.h.b16 %v101
    %v205 = vunpack.c.l.b16 %v102
    %v206 = vunpack.c.h.b16 %v102
    %v207 = vunpack.c.l.b16 %v103
    %v208 = vunpack.c.h.b16 %v103
    %v209 = vunpack.c.l.b16 %v104
    %v210 = vunpack.c.h.b16 %v104
    %v211 = vunpack.c.l.b16 %v105
    %v212 = vunpack.c.h.b16 %v105
    %v213 = vunpack.c.l.b16 %v106
    %v214 = vunpack.c.h.b16 %v106
    %v215 = vunpack.c.l.b16 %v107
    %v216 = vunpack.c.h.b16 %v107
    %v217 = vunpack.c.l.b16 %v108
    %v218 = vunpack.c.h.b16 %v108
    %v219 = vunpack.c.l.b16 %v109
    %v220 = vunpack.c.h.b16 %v109
    %v221 = vunpack.c.l.b16 %v110
    %v222 = vunpack.c.h.b16 %v110
    %v223 = vunpack.c.l.b16 %v111
    %v224 = vunpack.c.h.b16 %v111
    %v225 = vunpack.c.l.b16 %v112
    %v226 = vunpack.c.h.b16 %v112
    %v227 = vunpack.c.l.b16 %v113
    %v228 = vunpack.c.h.b16 %v113
    %v229 = vpack.c.b16 %v167, %v165
    %v230 = vpack.c.b16 %v168, %v166
    %v231 = vpack.c.b16 %v171, %v169
    %v232 = vpack.c.b16 %v172, %v170
    %v233 = vpack.c.b16 %v175, %v173
    %v234 = vpack.c.b16 %v176, %v174
    %v235 = vpack.c.b16 %v179, %v177
    %v236 = vpack.c.b16 %v180, %v178
    %v237 = vpack.c.b16 %v183, %v181
    %v238 = vpack.c.b16 %v184, %v182
    %v239 = vpack.c.b16 %v187, %v185
    %v240 = vpack.c.b16 %v188, %v186
    %v241 = vpack.c.b16 %v191, %v189
    %v242 = vpack.c.b16 %v192, %v190
    %v243 = vpack.c.b16 %v195, %v193
    %v244 = vpack.c.b16 %v196, %v194
    %v245 = vpack.c.b16 %v199, %v197
    %v246 = vpack.c.b16 %v200, %v198
    %v247 = vpack.c.b16 %v203, %v201
    %v248 = vpack.c.b16 %v204, %v202
    %v249 = vpack.c.b16 %v207, %v205
    %v250 = vpack.c.b16 %v208, %v206
    %v251 = vpack.c.b16 %v211, %v209
    %v252 = vpack.c.b16 %v212, %v210
    %v253 = vpack.c.b16 %v215, %v213
    %v254 = vpack.c.b16 %v216, %v214
    %v255 = vpack.c.b16 %v219, %v217
    %v256 = vpack.c.b16 %v220, %v218
    %v257 = vpack.c.b16 %v223, %v221
    %v258 = vpack.c.b16 %v224, %v222
    %v259 = vpack.c.b16 %v227, %v225
    %v260 = vpack.c.b16 %v228, %v226
    %293 = vmatprep.subr.bf16.mxu0 %v230
    %294 = vmatpush1.bf16.msra.mxu0 %v229
    %295 = vmatprep.subr.bf16.mxu0 %v232
    %296 = vmatpush1.bf16.msra.mxu0 %v231
    %297 = vmatprep.subr.bf16.mxu0 %v234
    %298 = vmatpush1.bf16.msra.mxu0 %v233
    %299 = vmatprep.subr.bf16.mxu0 %v236
    %300 = vmatpush1.bf16.msra.mxu0 %v235
    %301 = vmatprep.subr.bf16.mxu0 %v238
    %302 = vmatpush1.bf16.msra.mxu0 %v237
    %303 = vmatprep.subr.bf16.mxu0 %v240
    %304 = vmatpush1.bf16.msra.mxu0 %v239
    %305 = vmatprep.subr.bf16.mxu0 %v242
    %306 = vmatpush1.bf16.msra.mxu0 %v241
    %307 = vmatprep.subr.bf16.mxu0 %v244
    %308 = vmatpush1.bf16.msra.mxu0 %v243
    %309 = vmatprep.subr.bf16.mxu0 %v246
    %310 = vmatpush1.bf16.msra.mxu0 %v245
    %311 = vmatprep.subr.bf16.mxu0 %v248
    %312 = vmatpush1.bf16.msra.mxu0 %v247
    %313 = vmatprep.subr.bf16.mxu0 %v250
    %314 = vmatpush1.bf16.msra.mxu0 %v249
    %315 = vmatprep.subr.bf16.mxu0 %v252
    %316 = vmatpush1.bf16.msra.mxu0 %v251
    %317 = vmatprep.subr.bf16.mxu0 %v254
    %318 = vmatpush1.bf16.msra.mxu0 %v253
    %319 = vmatprep.subr.bf16.mxu0 %v256
    %320 = vmatpush1.bf16.msra.mxu0 %v255
    %321 = vmatprep.subr.bf16.mxu0 %v258
    %322 = vmatpush1.bf16.msra.mxu0 %v257
    %323 = vmatprep.subr.bf16.mxu0 %v260
    %324 = vmatpush1.bf16.msra.mxu0 %v259
    %325 = vmatprep.mubr.bf16.mxu0 %v130
    %326 = vmatmul.mubr.bf16.gmra.mrb[0].mxu0 %v129
    %v327 = vpop.f32.mrb[0].mxu0
    %v328 = vadd.f32 %v119, %v327
    %v329 = vpop.f32.mrb[0].mxu0
    %v330 = vadd.f32 %v123, %v329
    %v331 = vpop.f32.mrb[0].mxu0
    %v332 = vpop.f32.mrb[0].mxu0
    %333 = vdwg.mxu0
    %v334 = vmul.f32 %v328, 0.5
    %v335 = vmul.f32 %v330, 0.5
    %v336 = vmul.f32 %v328, 0.044715
    %v337 = vmul.f32 %v330, 0.044715
    %v338 = vmul.f32 %v336, %v328
    %v339 = vmul.f32 %v337, %v330
    %v340 = vmul.f32 %v338, %v328
    %v341 = vmul.f32 %v339, %v330
    %v342 = vadd.f32 %v328, %v340
    %v343 = vadd.f32 %v330, %v341
    %v344 = vmul.f32 %v342, 0.7978846
    %v345 = vmul.f32 %v343, 0.7978846
    %v346 = vtanh.pop %v344
    %v347 = vtanh.pop %v345
    %v348 = vadd.f32 %v346, 1.0
    %v349 = vadd.f32 %v347, 1.0
    %v350 = vmul.f32 %v334, %v348
    %v351 = vmul.f32 %v335, %v349
    %v352 = vpack.c.bf16 %v350, %v350
    %v353 = vpack.c.bf16 %v351, %v351
    %v354 = vld [vmem:[#allocation7] sm:$0xf]
    %v355 = vld [vmem:[#allocation7 + $0x4] sm:$0xf]
    %v356 = vld [vmem:[#allocation7 + $0x8] sm:$0xf]
    %v357 = vld [vmem:[#allocation7 + $0xc] sm:$0xf]
    %v358 = vld [vmem:[#allocation7 + $0x10] sm:$0xf]
    %v359 = vld [vmem:[#allocation7 + $0x14] sm:$0xf]
    %v360 = vld [vmem:[#allocation7 + $0x18] sm:$0xf]
    %v361 = vld [vmem:[#allocation7 + $0x1c] sm:$0xf]
    %v362 = vld [vmem:[#allocation7 + $0x20] sm:$0xf]
    %v363 = vld [vmem:[#allocation7 + $0x24] sm:$0xf]
    %v364 = vld [vmem:[#allocation7 + $0x28] sm:$0xf]
    %v365 = vld [vmem:[#allocation7 + $0x2c] sm:$0xf]
    %v366 = vld [vmem:[#allocation7 + $0x30] sm:$0xf]
    %v367 = vld [vmem:[#allocation7 + $0x34] sm:$0xf]
    %v368 = vld [vmem:[#allocation7 + $0x38] sm:$0xf]
    %v369 = vld [vmem:[#allocation7 + $0x3c] sm:$0xf]
    %v370 = vld [vmem:[#allocation7 + $0x40] sm:$0xf]
    %v371 = vld [vmem:[#allocation7 + $0x44] sm:$0xf]
    %v372 = vld [vmem:[#allocation7 + $0x48] sm:$0xf]
    %v373 = vld [vmem:[#allocation7 + $0x4c] sm:$0xf]
    %v374 = vld [vmem:[#allocation7 + $0x50] sm:$0xf]
    %v375 = vld [vmem:[#allocation7 + $0x54] sm:$0xf]
    %v376 = vld [vmem:[#allocation7 + $0x58] sm:$0xf]
    %v377 = vld [vmem:[#allocation7 + $0x5c] sm:$0xf]
    %v378 = vld [vmem:[#allocation7 + $0x60] sm:$0xf]
    %v379 = vld [vmem:[#allocation7 + $0x64] sm:$0xf]
    %v380 = vld [vmem:[#allocation7 + $0x68] sm:$0xf]
    %v381 = vld [vmem:[#allocation7 + $0x6c] sm:$0xf]
    %v382 = vld [vmem:[#allocation7 + $0x70] sm:$0xf]
    %v383 = vld [vmem:[#allocation7 + $0x74] sm:$0xf]
    %v384 = vld [vmem:[#allocation7 + $0x78] sm:$0xf]
    %v385 = vld [vmem:[#allocation7 + $0x7c] sm:$0xf]
    %v386 = vld [vmem:[%s4] sm:$0x1]
    %v388 = vlaneseq
    %v389 = vshrl.u32 %v388, 7
    %v390 = vsub.s32 0, %v389
    %v391 = vrot.slane %v386, %v390
    %v425 = vunpack.c.l.b16 %v354
    %v426 = vunpack.c.l.b16 %v355
    %v427 = vunpack.c.l.b16 %v356
    %v428 = vunpack.c.l.b16 %v357
    %v429 = vunpack.c.l.b16 %v358
    %v430 = vunpack.c.l.b16 %v359
    %v431 = vunpack.c.l.b16 %v360
    %v432 = vunpack.c.l.b16 %v361
    %v433 = vunpack.c.l.b16 %v362
    %v434 = vunpack.c.l.b16 %v363
    %v435 = vunpack.c.l.b16 %v364
    %v436 = vunpack.c.l.b16 %v365
    %v437 = vunpack.c.l.b16 %v366
    %v438 = vunpack.c.l.b16 %v367
    %v439 = vunpack.c.l.b16 %v368
    %v440 = vunpack.c.l.b16 %v369
    %v441 = vunpack.c.l.b16 %v370
    %v442 = vunpack.c.l.b16 %v371
    %v443 = vunpack.c.l.b16 %v372
    %v444 = vunpack.c.l.b16 %v373
    %v445 = vunpack.c.l.b16 %v374
    %v446 = vunpack.c.l.b16 %v375
    %v447 = vunpack.c.l.b16 %v376
    %v448 = vunpack.c.l.b16 %v377
    %v449 = vunpack.c.l.b16 %v378
    %v450 = vunpack.c.l.b16 %v379
    %v451 = vunpack.c.l.b16 %v380
    %v452 = vunpack.c.l.b16 %v381
    %v453 = vunpack.c.l.b16 %v382
    %v454 = vunpack.c.l.b16 %v383
    %v455 = vunpack.c.l.b16 %v384
    %v456 = vunpack.c.l.b16 %v385
    %v457 = vpack.c.b16 %v426, %v425
    %v458 = vpack.c.b16 %v428, %v427
    %v459 = vpack.c.b16 %v430, %v429
    %v460 = vpack.c.b16 %v432, %v431
    %v461 = vpack.c.b16 %v434, %v433
    %v462 = vpack.c.b16 %v436, %v435
    %v463 = vpack.c.b16 %v438, %v437
    %v464 = vpack.c.b16 %v440, %v439
    %v465 = vpack.c.b16 %v442, %v441
    %v466 = vpack.c.b16 %v444, %v443
    %v467 = vpack.c.b16 %v446, %v445
    %v468 = vpack.c.b16 %v448, %v447
    %v469 = vpack.c.b16 %v450, %v449
    %v470 = vpack.c.b16 %v452, %v451
    %v471 = vpack.c.b16 %v454, %v453
    %v472 = vpack.c.b16 %v456, %v455
    %489 = vmatprep.subr.bf16.mxu0 0
    %490 = vmatpush1.bf16.msra.mxu0 %v457
    %491 = vmatprep.subr.bf16.mxu0 0
    %492 = vmatpush1.bf16.msra.mxu0 %v458
    %493 = vmatprep.subr.bf16.mxu0 0
    %494 = vmatpush1.bf16.msra.mxu0 %v459
    %495 = vmatprep.subr.bf16.mxu0 0
    %496 = vmatpush1.bf16.msra.mxu0 %v460
    %497 = vmatprep.subr.bf16.mxu0 0
    %498 = vmatpush1.bf16.msra.mxu0 %v461
    %499 = vmatprep.subr.bf16.mxu0 0
    %500 = vmatpush1.bf16.msra.mxu0 %v462
    %501 = vmatprep.subr.bf16.mxu0 0
    %502 = vmatpush1.bf16.msra.mxu0 %v463
    %503 = vmatprep.subr.bf16.mxu0 0
    %504 = vmatpush1.bf16.msra.mxu0 %v464
    %505 = vmatprep.subr.bf16.mxu0 0
    %506 = vmatpush1.bf16.msra.mxu0 %v465
    %507 = vmatprep.subr.bf16.mxu0 0
    %508 = vmatpush1.bf16.msra.mxu0 %v466
    %509 = vmatprep.subr.bf16.mxu0 0
    %510 = vmatpush1.bf16.msra.mxu0 %v467
    %511 = vmatprep.subr.bf16.mxu0 0
    %512 = vmatpush1.bf16.msra.mxu0 %v468
    %513 = vmatprep.subr.bf16.mxu0 0
    %514 = vmatpush1.bf16.msra.mxu0 %v469
    %515 = vmatprep.subr.bf16.mxu0 0
    %516 = vmatpush1.bf16.msra.mxu0 %v470
    %517 = vmatprep.subr.bf16.mxu0 0
    %518 = vmatpush1.bf16.msra.mxu0 %v471
    %519 = vmatprep.subr.bf16.mxu0 0
    %520 = vmatpush1.bf16.msra.mxu0 %v472
    %521 = vmatprep.mubr.bf16.mxu0 %v353
    %522 = vmatmul.mubr.bf16.gmra.mrb[0].mxu0 %v352
    %v523 = vpop.f32.mrb[0].mxu0
    %v524 = vadd.f32 %v391, %v523
    %v525 = vpop.f32.mrb[0].mxu0
    %v526 = vpop.f32.mrb[0].mxu0
    %v527 = vpop.f32.mrb[0].mxu0
    %528 = vdwg.mxu0
    %v529 = vmul.f32 %v524, 0.5
    %v530 = vmul.f32 %v524, 0.044715
    %v531 = vmul.f32 %v530, %v524
    %v532 = vmul.f32 %v531, %v524
    %v533 = vadd.f32 %v524, %v532
    %v534 = vmul.f32 %v533, 0.7978846
    %v535 = vtanh.pop %v534
    %v536 = vadd.f32 %v535, 1.0
    %v537 = vmul.f32 %v529, %v536
    %v538 = vpack.c.bf16 %v537, %v537
    %v539 = vld [vmem:[#allocation8] sm:$0xf]
    %v540 = vld [vmem:[#allocation8 + $0x4] sm:$0xf]
    %v541 = vld [vmem:[#allocation8 + $0x8] sm:$0xf]
    %v542 = vld [vmem:[#allocation8 + $0xc] sm:$0xf]
    %v543 = vld [vmem:[#allocation8 + $0x10] sm:$0xf]
    %v544 = vld [vmem:[#allocation8 + $0x14] sm:$0xf]
    %v545 = vld [vmem:[#allocation8 + $0x18] sm:$0xf]
    %v546 = vld [vmem:[#allocation8 + $0x1c] sm:$0xf]
    %v547 = vld [vmem:[#allocation8 + $0x20] sm:$0xf]
    %v548 = vld [vmem:[#allocation8 + $0x24] sm:$0xf]
    %v549 = vld [vmem:[#allocation8 + $0x28] sm:$0xf]
    %v550 = vld [vmem:[#allocation8 + $0x2c] sm:$0xf]
    %v551 = vld [vmem:[#allocation8 + $0x30] sm:$0xf]
    %v552 = vld [vmem:[#allocation8 + $0x34] sm:$0xf]
    %v553 = vld [vmem:[#allocation8 + $0x38] sm:$0xf]
    %v554 = vld [vmem:[#allocation8 + $0x3c] sm:$0xf]
    %v555 = vld [vmem:[%s6] sm:$0x1]
    %v557 = vlaneseq
    %v558 = vshrl.u32 %v557, 7
    %v559 = vsub.s32 0, %v558
    %v560 = vrot.slane %v555, %v559
    %v578 = vunpack.c.l.b16 %v539
    %v579 = vunpack.c.l.b16 %v540
    %v580 = vunpack.c.l.b16 %v541
    %v581 = vunpack.c.l.b16 %v542
    %v582 = vunpack.c.l.b16 %v543
    %v583 = vunpack.c.l.b16 %v544
    %v584 = vunpack.c.l.b16 %v545
    %v585 = vunpack.c.l.b16 %v546
    %v586 = vunpack.c.l.b16 %v547
    %v587 = vunpack.c.l.b16 %v548
    %v588 = vunpack.c.l.b16 %v549
    %v589 = vunpack.c.l.b16 %v550
    %v590 = vunpack.c.l.b16 %v551
    %v591 = vunpack.c.l.b16 %v552
    %v592 = vunpack.c.l.b16 %v553
    %v593 = vunpack.c.l.b16 %v554
    %v594 = vpack.c.b16 %v579, %v578
    %v595 = vpack.c.b16 %v581, %v580
    %v596 = vpack.c.b16 %v583, %v582
    %v597 = vpack.c.b16 %v585, %v584
    %v598 = vpack.c.b16 %v587, %v586
    %v599 = vpack.c.b16 %v589, %v588
    %v600 = vpack.c.b16 %v591, %v590
    %v601 = vpack.c.b16 %v593, %v592
    %610 = vmatprep.subr.bf16.mxu0 0
    %611 = vmatpush1.bf16.msra.mxu0 %v594
    %612 = vmatprep.subr.bf16.mxu0 0
    %613 = vmatpush1.bf16.msra.mxu0 %v595
    %614 = vmatprep.subr.bf16.mxu0 0
    %615 = vmatpush1.bf16.msra.mxu0 %v596
    %616 = vmatprep.subr.bf16.mxu0 0
    %617 = vmatpush1.bf16.msra.mxu0 %v597
    %618 = vmatprep.subr.bf16.mxu0 0
    %619 = vmatpush1.bf16.msra.mxu0 %v598
    %620 = vmatprep.subr.bf16.mxu0 0
    %621 = vmatpush1.bf16.msra.mxu0 %v599
    %622 = vmatprep.subr.bf16.mxu0 0
    %623 = vmatpush1.bf16.msra.mxu0 %v600
    %624 = vmatprep.subr.bf16.mxu0 0
    %625 = vmatpush1.bf16.msra.mxu0 %v601
    %626 = vmatprep.subr.bf16.mxu0 0
    %627 = vmatpush1.bf16.msra.mxu0 0
    %628 = vmatprep.subr.bf16.mxu0 0
    %629 = vmatpush1.bf16.msra.mxu0 0
    %630 = vmatprep.subr.bf16.mxu0 0
    %631 = vmatpush1.bf16.msra.mxu0 0
    %632 = vmatprep.subr.bf16.mxu0 0
    %633 = vmatpush1.bf16.msra.mxu0 0
    %634 = vmatprep.subr.bf16.mxu0 0
    %635 = vmatpush1.bf16.msra.mxu0 0
    %636 = vmatprep.subr.bf16.mxu0 0
    %637 = vmatpush1.bf16.msra.mxu0 0
    %638 = vmatprep.subr.bf16.mxu0 0
    %639 = vmatpush1.bf16.msra.mxu0 0
    %640 = vmatprep.subr.bf16.mxu0 0
    %641 = vmatpush1.bf16.msra.mxu0 0
    %642 = vmatprep.mubr.bf16.mxu0 0
    %643 = vmatmul.mubr.bf16.gmra.mrb[0].mxu0 %v538
    %v644 = vpop.f32.mrb[0].mxu0
    %v645 = vadd.f32 %v560, %v644
    %v646 = vpop.f32.mrb[0].mxu0
    %v647 = vpop.f32.mrb[0].mxu0
    %v648 = vpop.f32.mrb[0].mxu0
    %649 = vdwg.mxu0
    %650 = vst [vmem:[#allocation10] sm:$0xff] %v645
    // Predicated region
    $region46: #{tpu_custom_call.1} parent=1 // pred_check
      _
    $region47: #{tpu_custom_call.1} parent=1 // pred_check_branch
      %652 = sbr.rel (0) target = $region49
    $region48: #{tpu_custom_call.1} parent=1 // pred_region
      %s654 = ssub.s32 128, 128
      %655 = vsyncadd [#allocation4], %s654
      %s657 = sshll.u32 [#allocation10], 4
      %s658 = int_to_ptr.vmem [resolvable:$true] %s657
      %660 = dma.vmem_to_hbm [thread:$0]  %s658, 128, %s7, [#allocation4]
    $region49: #{tpu_custom_call.1} parent=1 // pred_fallthru
      _
    // Predicated region
    $region50: #{tpu_custom_call.1} parent=1 // pred_check
      _
    $region51: #{tpu_custom_call.1} parent=1 // pred_check_branch
      %662 = sbr.rel (0) target = $region53
    $region52: #{tpu_custom_call.1} parent=1 // pred_region
      %663 = dma.done [#allocation4], 128
    $region53: #{tpu_custom_call.1} parent=1 // pred_fallthru
      _
    %664 = vsyncpa [#allocation3], 1
    %665 = vsyncpa [#allocation6], 1
    %666 = vsyncpa [#allocation9], 1
    %667 = vsyncpa [#allocation4], 1

</llo_original>
